<compile_context>
chip_gen: v6e
topology: v6e:2x2x1
jax: 0.10.0
libtpu: 0.0.40
codegen_flags: <defaults>
</compile_context>

<pallas_src>
import functools

import jax
import jax.numpy as jnp
from jax.experimental import pallas as pl
from jax.experimental.pallas import tpu as pltpu


# ----------------------------------------------------------------------------
# helpers
# ----------------------------------------------------------------------------
def _round_up(a, b):
    return ((a + b - 1) // b) * b


def _sublane(dtype):
    # rows per sublane tile in VMEM (packed dtypes stack along sublanes)
    return {4: 8, 2: 16, 1: 32}.get(jnp.dtype(dtype).itemsize, 8)


def _vmem_capacity_bytes():
    try:
        return int(pltpu.get_tpu_info().vmem_capacity_bytes)
    except Exception:
        return 64 * 1024 * 1024  # conservative: v7x per-TensorCore physical VMEM


def _excite(pooled, w1, b1, w2, b2, use_mxu):
    """SE 'excite' MLP: pooled (TB, C) f32 -> sigmoid scale (TB, C) f32."""
    if use_mxu:
        h = jnp.dot(pooled, w1, preferred_element_type=jnp.float32) + b1
    else:
        # tiny C/D: VPU broadcast-multiply + XLU reduce beats a padded MXU matmul
        h = jnp.sum(pooled[:, :, None] * w1[None, :, :], axis=1) + b1
    h = h * jax.nn.sigmoid(h)  # Swish
    if use_mxu:
        s = jnp.dot(h, w2, preferred_element_type=jnp.float32) + b2
    else:
        s = jnp.sum(h[:, :, None] * w2[None, :, :], axis=1) + b2
    return jax.nn.sigmoid(s)


# ----------------------------------------------------------------------------
# kernels
# ----------------------------------------------------------------------------
def _saenet_fused_kernel(x_ref, w1_ref, b1_ref, w2_ref, b2_ref, o_ref, *,
                         inv_hw, use_mxu):
    """Single pass: pool + excite + scale for a (TB, C, HW) batch slab."""
    x = x_ref[...]                                             # (TB, C, HW), io dtype
    pooled = jnp.sum(x.astype(jnp.float32), axis=-1) * inv_hw  # (TB, C) f32
    scale = _excite(pooled, w1_ref[...], b1_ref[...],
                    w2_ref[...], b2_ref[...], use_mxu)         # (TB, C) f32
    o_ref[...] = (x.astype(jnp.float32) * scale[:, :, None]).astype(o_ref.dtype)


def _saenet_pool_excite_kernel(x_ref, w1_ref, b1_ref, w2_ref, b2_ref,
                               scale_ref, acc_ref, *, hw, chunk, inv_hw, use_mxu):
    """Fallback pass 1: stream HW chunks, accumulate pooled sum, emit scale."""
    j = pl.program_id(1)

    @pl.when(j == 0)
    def _():
        acc_ref[...] = jnp.zeros_like(acc_ref)

    x = x_ref[...]                                             # (1, C, chunk)
    lane = jax.lax.broadcasted_iota(jnp.int32, x.shape, dimension=2)
    valid = (j * chunk + lane) < hw                            # mask partial last chunk
    acc_ref[...] += jnp.sum(jnp.where(valid, x.astype(jnp.float32), 0.0), axis=-1)

    @pl.when(j == pl.num_programs(1) - 1)
    def _():
        pooled = acc_ref[...] * inv_hw                         # (1, C)
        s = _excite(pooled, w1_ref[...], b1_ref[...],
                    w2_ref[...], b2_ref[...], use_mxu)         # (1, C)
        scale_ref[...] = s[:, None, :]                         # (1, 1, C)


# ----------------------------------------------------------------------------
# wrapper
# ----------------------------------------------------------------------------
def saenet_forward(x_nchw, w1, b1, w2, b2, *, vmem_budget_bytes=None):
    """SaENet forward.

    x_nchw: (B, C, H, W) f32 or bf16 (output matches x dtype).
    w1: (C, D), b1: (1, D), w2: (D, C), b2: (1, C)  (kept in f32).
    """
    B, C, H, W = x_nchw.shape
    D = w1.shape[1]
    hw = H * W
    dtype = x_nchw.dtype
    elem = jnp.dtype(dtype).itemsize
    sub = _sublane(dtype)

    w1 = jnp.asarray(w1, jnp.float32)
    b1 = jnp.asarray(b1, jnp.float32).reshape(1, D)
    w2 = jnp.asarray(w2, jnp.float32)
    b2 = jnp.asarray(b2, jnp.float32).reshape(1, C)

    cap = _vmem_capacity_bytes()
    if vmem_budget_bytes is None:
        # total budget for the double-buffered in+out blocks + weight blocks;
        # stays well under v7x's 64 MiB physical and v5e/v6e's 128 MiB.
        vmem_budget_bytes = min(int(cap * 0.65), 64 * 1024 * 1024)

    # Real VMEM footprints use sublane/lane-rounded extents.
    hw_vmem = _round_up(hw, 128)
    c_vmem = _round_up(C, sub)
    per_batch_vmem = c_vmem * hw_vmem * elem          # one buffer, one batch row

    # weight/bias blocks (f32), conservatively counted as double-buffered
    weights_vmem = 2 * 4 * (_round_up(C, 8) * _round_up(D, 128)
                            + 8 * _round_up(D, 128)
                            + _round_up(D, 8) * _round_up(C, 128)
                            + 8 * _round_up(C, 128))

    use_mxu = (C >= 128) or (D >= 128)
    inv_hw = 1.0 / float(hw)
    x_flat = x_nchw.reshape(B, C, hw)                 # layout no-op

    reserve = 1 << 20                                  # compiler-internal scratch
    avail = vmem_budget_bytes - weights_vmem - reserve
    tb_max = avail // (4 * per_batch_vmem) if avail > 0 else 0

    if tb_max >= 1:
        # ------------------ fused single-pass kernel ------------------------
        divisors = [d for d in range(1, B + 1) if B % d == 0 and d <= tb_max]
        MIN_BLOCK = 1 << 20                            # ~85% of HBM roofline
        big = [d for d in divisors if d * per_batch_vmem >= MIN_BLOCK]
        if not big:
            tb = divisors[-1]                          # tiny problem: fewest steps
        else:
            def _steps(d):
                return B // d
            cand4 = [d for d in big if _steps(d) >= 4 and _steps(d) % 2 == 0]
            cand2 = [d for d in big if _steps(d) >= 2]
            if cand4:
                tb = max(cand4)     # >=2 steps per v7x TensorCore, even count
            elif cand2:
                tb = max(cand2)     # at least some pipelining / megacore split
            else:
                tb = max(big)

        footprint = 4 * tb * per_batch_vmem + weights_vmem
        vmem_limit = int(footprint * 1.25) + (2 << 20)

        cost = pl.CostEstimate(
            flops=int(3 * B * C * hw + 4 * B * C * D),
            transcendentals=int(B * (C + D)),
            bytes_accessed=int(2 * B * C * hw * elem
                               + (2 * C * D + C + D) * 4),
        )

        out_flat = pl.pallas_call(
            functools.partial(_saenet_fused_kernel, inv_hw=inv_hw, use_mxu=use_mxu),
            out_shape=jax.ShapeDtypeStruct((B, C, hw), dtype),
            grid_spec=pltpu.PrefetchScalarGridSpec(
                num_scalar_prefetch=0,
                grid=(B // tb,),
                in_specs=[
                    pl.BlockSpec((tb, C, hw), lambda b: (b, 0, 0)),   # x slab
                    pl.BlockSpec((C, D), lambda b: (0, 0)),           # w1
                    pl.BlockSpec((1, D), lambda b: (0, 0)),           # b1
                    pl.BlockSpec((D, C), lambda b: (0, 0)),           # w2
                    pl.BlockSpec((1, C), lambda b: (0, 0)),           # b2
                ],
                out_specs=pl.BlockSpec((tb, C, hw), lambda b: (b, 0, 0)),
            ),
            compiler_params=pltpu.CompilerParams(
                dimension_semantics=("parallel",),
                vmem_limit_bytes=vmem_limit),
            cost_estimate=cost,
        )(x_flat, w1, b1, w2, b2)

        return out_flat.reshape(B, C, H, W)

    # ------------------ two-pass fallback (slab > VMEM budget) --------------
    # Pass 1 (Pallas): stream HW chunks, pooled sum in VMEM scratch across the
    # "arbitrary" chunk axis, excite MLP on the last chunk -> (B, 1, C) scale.
    chunk_budget = max(2 << 20, (vmem_budget_bytes - weights_vmem - reserve) // 2)
    chunk = (chunk_budget // (4 * c_vmem * elem)) // 128 * 128
    chunk = max(128, min(chunk, _round_up(hw, 128)))
    n_chunks = -(-hw // chunk)

    fb_footprint = 4 * c_vmem * chunk * elem + weights_vmem + 16 * _round_up(C, 128) * 4
    vmem_limit = int(fb_footprint * 1.25) + (2 << 20)

    cost1 = pl.CostEstimate(
        flops=int(B * C * hw + 4 * B * C * D),
        transcendentals=int(B * (C + D)),
        bytes_accessed=int(B * C * hw * elem + (2 * C * D + C + D) * 4 + B * C * 4),
    )

    scale = pl.pallas_call(
        functools.partial(_saenet_pool_excite_kernel, hw=hw, chunk=chunk,
                          inv_hw=inv_hw, use_mxu=use_mxu),
        out_shape=jax.ShapeDtypeStruct((B, 1, C), jnp.float32),
        grid_spec=pltpu.PrefetchScalarGridSpec(
            num_scalar_prefetch=0,
            grid=(B, n_chunks),
            in_specs=[
                pl.BlockSpec((1, C, chunk), lambda b, j: (b, 0, j)),
                pl.BlockSpec((C, D), lambda b, j: (0, 0)),
                pl.BlockSpec((1, D), lambda b, j: (0, 0)),
                pl.BlockSpec((D, C), lambda b, j: (0, 0)),
                pl.BlockSpec((1, C), lambda b, j: (0, 0)),
            ],
            out_specs=pl.BlockSpec((1, 1, C), lambda b, j: (b, 0, 0)),
            scratch_shapes=[pltpu.VMEM((1, C), jnp.float32)],
        ),
        compiler_params=pltpu.CompilerParams(
            dimension_semantics=("parallel", "arbitrary"),
            vmem_limit_bytes=vmem_limit),
        cost_estimate=cost1,
    )(x_flat, w1, b1, w2, b2)

    # Pass 2: broadcast scale over H, W — a single fused XLA elementwise pass.
    scale_bc = scale[:, 0, :][:, :, None, None]
    return (x_nchw.astype(jnp.float32) * scale_bc).astype(dtype)


# ----------------------------------------------------------------------------
# pure-JAX reference (matches the PyTorch semantics)
# ----------------------------------------------------------------------------
def saenet_reference(x, w1, b1, w2, b2):
    pooled = jnp.mean(x, axis=(2, 3))                  # (B, C)
    h = pooled @ w1 + b1                               # (B, D)
    h = h * jax.nn.sigmoid(h)                          # Swish
    s = jax.nn.sigmoid(h @ w2 + b2)                    # (B, C)
    return s[:, :, None, None] * x


# ----------------------------------------------------------------------------
# main
# ----------------------------------------------------------------------------
if __name__ == "__main__":
    key = jax.random.PRNGKey(0)

    def make_params(k, C, D):
        kw1, kb1, kw2, kb2 = jax.random.split(k, 4)
        w1 = jax.random.normal(kw1, (C, D), jnp.float32) * 0.1
        b1 = jax.random.normal(kb1, (1, D), jnp.float32) * 0.1
        w2 = jax.random.normal(kw2, (D, C), jnp.float32) * 0.1
        b2 = jax.random.normal(kb2, (1, C), jnp.float32) * 0.1
        return w1, b1, w2, b2

    # --- Test 1: module-sized shapes (SaENet(4, 8)), f32, fused kernel ------
    k1, k2, key = jax.random.split(key, 3)
    B, C, H, W, D = 2, 4, 16, 16, 8
    x = jax.random.normal(k1, (B, C, H, W), jnp.float32)
    params = make_params(k2, C, D)
    out = jax.block_until_ready(saenet_forward(x, *params))
    ref = saenet_reference(x, *params)
    assert out.shape == x.shape
    assert jnp.allclose(out, ref, atol=1e-5, rtol=1e-5), "test1 mismatch"

    # --- Test 2: non-multiple-of-128 spatial + odd batch (masked stores) ----
    k3, k4, key = jax.random.split(key, 3)
    B, C, H, W, D = 3, 4, 15, 15, 8
    x = jax.random.normal(k3, (B, C, H, W), jnp.float32)
    params = make_params(k4, C, D)
    out = jax.block_until_ready(saenet_forward(x, *params))
    ref = saenet_reference(x, *params)
    assert jnp.allclose(out, ref, atol=1e-5, rtol=1e-5), "test2 mismatch"

    # --- Test 3: bf16 activation I/O (weights f32, math in f32) -------------
    k5, k6, key = jax.random.split(key, 3)
    B, C, H, W, D = 2, 8, 16, 16, 4
    x16 = jax.random.normal(k5, (B, C, H, W), jnp.float32).astype(jnp.bfloat16)
    params = make_params(k6, C, D)
    out = jax.block_until_ready(saenet_forward(x16, *params))
    ref = saenet_reference(x16.astype(jnp.float32), *params)
    assert out.dtype == jnp.bfloat16
    assert jnp.allclose(out.astype(jnp.float32), ref, atol=5e-2, rtol=5e-2), \
        "test3 mismatch"

    # --- Test 4: forced two-pass fallback (slab exceeds VMEM budget) --------
    k7, k8 = jax.random.split(key, 2)
    B, C, H, W, D = 2, 256, 48, 48, 32
    x = jax.random.normal(k7, (B, C, H, W), jnp.float32)
    params = make_params(k8, C, D)
    out = jax.block_until_ready(
        saenet_forward(x, *params, vmem_budget_bytes=8 * 1024 * 1024))
    ref = saenet_reference(x, *params)
    assert jnp.allclose(out, ref, atol=1e-4, rtol=1e-4), "test4 mismatch"

    print("KERNEL_OK")
</pallas_src>

<mosaic_0001>
module attributes {stable_mosaic.version = 11 : i64} {
  func.func @_saenet_fused_kernel(%arg0: i32, %arg1: memref<2x4x256xf32, #tpu.memory_space<vmem>>, %arg2: memref<4x8xf32, #tpu.memory_space<vmem>>, %arg3: memref<1x8xf32, #tpu.memory_space<vmem>>, %arg4: memref<8x4xf32, #tpu.memory_space<vmem>>, %arg5: memref<1x4xf32, #tpu.memory_space<vmem>>, %arg6: memref<2x4x256xf32, #tpu.memory_space<vmem>>) attributes {dimension_semantics = [#tpu.dimension_semantics<parallel>], iteration_bounds = array<i64: 1>, scalar_prefetch = 0 : i64, scratch_operands = 0 : i64, tpu.core_type = #tpu.core_type<tc>, window_params = [{transform_indices = @transform_0, window_bounds = array<i64: 2, 4, 256>}, {pipeline_mode = #tpu.pipeline_mode<synchronous>, transform_indices = @transform_1, window_bounds = array<i64: 4, 8>}, {pipeline_mode = #tpu.pipeline_mode<synchronous>, transform_indices = @transform_2, window_bounds = array<i64: 1, 8>}, {pipeline_mode = #tpu.pipeline_mode<synchronous>, transform_indices = @transform_3, window_bounds = array<i64: 8, 4>}, {pipeline_mode = #tpu.pipeline_mode<synchronous>, transform_indices = @transform_4, window_bounds = array<i64: 1, 4>}, {transform_indices = @transform_5, window_bounds = array<i64: 2, 4, 256>}]} {
    %c0 = arith.constant 0 : index
    %c0_0 = arith.constant 0 : index
    %c0_1 = arith.constant 0 : index
    %0 = vector.load %arg1[%c0, %c0_0, %c0_1] : memref<2x4x256xf32, #tpu.memory_space<vmem>>, vector<2x4x256xf32>
    %cst = arith.constant dense<0.000000e+00> : vector<2x4xf32>
    %1 = vector.multi_reduction <add>, %0, %cst [2] : vector<2x4x256xf32> to vector<2x4xf32>
    %cst_2 = arith.constant 3.906250e-03 : f32
    %2 = vector.broadcast %cst_2 : f32 to vector<2x4xf32>
    %3 = arith.mulf %1, %2 : vector<2x4xf32>
    %c0_3 = arith.constant 0 : index
    %c0_4 = arith.constant 0 : index
    %4 = vector.load %arg2[%c0_3, %c0_4] : memref<4x8xf32, #tpu.memory_space<vmem>>, vector<4x8xf32>
    %c0_5 = arith.constant 0 : index
    %c0_6 = arith.constant 0 : index
    %5 = vector.load %arg3[%c0_5, %c0_6] : memref<1x8xf32, #tpu.memory_space<vmem>>, vector<1x8xf32>
    %c0_7 = arith.constant 0 : index
    %c0_8 = arith.constant 0 : index
    %6 = vector.load %arg4[%c0_7, %c0_8] : memref<8x4xf32, #tpu.memory_space<vmem>>, vector<8x4xf32>
    %c0_9 = arith.constant 0 : index
    %c0_10 = arith.constant 0 : index
    %7 = vector.load %arg5[%c0_9, %c0_10] : memref<1x4xf32, #tpu.memory_space<vmem>>, vector<1x4xf32>
    %8 = vector.shape_cast %3 : vector<2x4xf32> to vector<2x4x1xf32>
    %9 = vector.shape_cast %4 : vector<4x8xf32> to vector<1x4x8xf32>
    %10 = vector.broadcast %8 : vector<2x4x1xf32> to vector<2x4x8xf32>
    %11 = vector.broadcast %9 : vector<1x4x8xf32> to vector<2x4x8xf32>
    %12 = arith.mulf %10, %11 : vector<2x4x8xf32>
    %cst_11 = arith.constant dense<0.000000e+00> : vector<2x8xf32>
    %13 = vector.multi_reduction <add>, %12, %cst_11 [1] : vector<2x4x8xf32> to vector<2x8xf32>
    %14 = vector.broadcast %5 : vector<1x8xf32> to vector<2x8xf32>
    %15 = arith.addf %13, %14 : vector<2x8xf32>
    %16 = arith.negf %15 : vector<2x8xf32>
    %17 = math.exp %16 : vector<2x8xf32>
    %cst_12 = arith.constant 1.000000e+00 : f32
    %18 = vector.broadcast %cst_12 : f32 to vector<2x8xf32>
    %19 = arith.addf %18, %17 : vector<2x8xf32>
    %20 = arith.divf %18, %19 : vector<2x8xf32>
    %21 = arith.mulf %15, %20 : vector<2x8xf32>
    %22 = vector.shape_cast %21 : vector<2x8xf32> to vector<2x8x1xf32>
    %23 = vector.shape_cast %6 : vector<8x4xf32> to vector<1x8x4xf32>
    %24 = vector.broadcast %22 : vector<2x8x1xf32> to vector<2x8x4xf32>
    %25 = vector.broadcast %23 : vector<1x8x4xf32> to vector<2x8x4xf32>
    %26 = arith.mulf %24, %25 : vector<2x8x4xf32>
    %cst_13 = arith.constant dense<0.000000e+00> : vector<2x4xf32>
    %27 = vector.multi_reduction <add>, %26, %cst_13 [1] : vector<2x8x4xf32> to vector<2x4xf32>
    %28 = vector.broadcast %7 : vector<1x4xf32> to vector<2x4xf32>
    %29 = arith.addf %27, %28 : vector<2x4xf32>
    %30 = arith.negf %29 : vector<2x4xf32>
    %31 = math.exp %30 : vector<2x4xf32>
    %cst_14 = arith.constant 1.000000e+00 : f32
    %32 = vector.broadcast %cst_14 : f32 to vector<2x4xf32>
    %33 = arith.addf %32, %31 : vector<2x4xf32>
    %34 = arith.divf %32, %33 : vector<2x4xf32>
    %35 = vector.shape_cast %34 : vector<2x4xf32> to vector<2x4x1xf32>
    %36 = vector.broadcast %35 : vector<2x4x1xf32> to vector<2x4x256xf32>
    %37 = arith.mulf %0, %36 : vector<2x4x256xf32>
    %c0_15 = arith.constant 0 : index
    %c0_16 = arith.constant 0 : index
    %c0_17 = arith.constant 0 : index
    %38 = vector.load %arg6[%c0_15, %c0_16, %c0_17] : memref<2x4x256xf32, #tpu.memory_space<vmem>>, vector<2x4x256xf32>
    tpu.vector_store %arg6[%c0_15, %c0_16, %c0_17], %37 {strides = array<i32>} : memref<2x4x256xf32, #tpu.memory_space<vmem>>, vector<2x4x256xf32>,
    return
  }
  func.func @transform_0(%arg0: i32) -> (i32, i32, i32) {
    %c0_i32 = arith.constant 0 : i32
    %c0_i32_0 = arith.constant 0 : i32
    %c0_i32_1 = arith.constant 0 : i32
    return %arg0, %c0_i32, %c0_i32_0 : i32, i32, i32
  }
  func.func @transform_1(%arg0: i32) -> (i32, i32) {
    %c0_i32 = arith.constant 0 : i32
    %c0_i32_0 = arith.constant 0 : i32
    %c0_i32_1 = arith.constant 0 : i32
    return %c0_i32, %c0_i32_0 : i32, i32
  }
  func.func @transform_2(%arg0: i32) -> (i32, i32) {
    %c0_i32 = arith.constant 0 : i32
    %c0_i32_0 = arith.constant 0 : i32
    %c0_i32_1 = arith.constant 0 : i32
    return %c0_i32, %c0_i32_0 : i32, i32
  }
  func.func @transform_3(%arg0: i32) -> (i32, i32) {
    %c0_i32 = arith.constant 0 : i32
    %c0_i32_0 = arith.constant 0 : i32
    %c0_i32_1 = arith.constant 0 : i32
    return %c0_i32, %c0_i32_0 : i32, i32
  }
  func.func @transform_4(%arg0: i32) -> (i32, i32) {
    %c0_i32 = arith.constant 0 : i32
    %c0_i32_0 = arith.constant 0 : i32
    %c0_i32_1 = arith.constant 0 : i32
    return %c0_i32, %c0_i32_0 : i32, i32
  }
  func.func @transform_5(%arg0: i32) -> (i32, i32, i32) {
    %c0_i32 = arith.constant 0 : i32
    %c0_i32_0 = arith.constant 0 : i32
    %c0_i32_1 = arith.constant 0 : i32
    return %arg0, %c0_i32, %c0_i32_0 : i32, i32, i32
  }
}

</mosaic_0001>

<llo_original>
// kernel: tpu_custom_call.1
$region0: #{tpu_custom_call.1}
  #allocation0 [shape = 'u32[]', space=smem, size = 0x4, offset = 0x4, fixed_abs, tag = 'smem constant byte address 0x4 - core index']
  #allocation1 [shape = 'u32[144,128]{1,0:T(1,128)}', space=vmem, size = 0x12000, scoped, tag = 'internal scratch']
  %s0 = inlined_call_operand.hbm [shape: f32[2,4,256], index: 0, kind: input, shape index: {}]
  %s1 = inlined_call_operand.vmem [shape: f32[4,8], index: 1, kind: input, shape index: {}]
  %s2 = inlined_call_operand.vmem [shape: f32[1,8], index: 2, kind: input, shape index: {}]
  %s3 = inlined_call_operand.vmem [shape: f32[8,4], index: 3, kind: input, shape index: {}]
  %s4 = inlined_call_operand.vmem [shape: f32[1,4], index: 4, kind: input, shape index: {}]
  %s5 = inlined_call_operand.hbm [shape: f32[2,4,256], index: 5, kind: output, shape index: {}]
  %s6 = sld [smem:[#allocation0]]
  $region34: #{tpu_custom_call.1} parent=0
    _
  %s8 = ssub.s32 1, %s6
  %s9 = scalar_select 0, %s8, %s6
  $region1: #{tpu_custom_call.1} parent=0
    #allocation2 [shape = 'u8[8192]{0}', space=vmem, size = 0x2000, scoped, tag = 'input window, operand 0, single buffered']
    #allocation3 [shape = 's32[1]{0}', space=sflag, size = 0x4, scoped, tag = 'scoped memory for tpu_custom_call.1']
    #allocation4 [shape = 's32[1]{0}', space=sflag, size = 0x4, scoped, tag = 'scoped memory for tpu_custom_call.1']
    #allocation5 [shape = 'u8[8192]{0}', space=vmem, size = 0x2000, scoped, tag = 'output window, operand 0, single buffered']
    %10 = vsyncpa [#allocation3], 0
    %11 = vsyncpa [#allocation4], 0
    // Predicated region
    $region2: #{tpu_custom_call.1} parent=1 // pred_check
      _
    $region3: #{tpu_custom_call.1} parent=1 // pred_check_branch
      %13 = sbr.rel (0) target = $region5
    $region4: #{tpu_custom_call.1} parent=1 // pred_region
      %s15 = ssub.s32 256, 256
      %16 = vsyncadd [#allocation3], %s15
      %s17 = sshll.u32 [#allocation2], 4
      %s18 = int_to_ptr.vmem [resolvable:$true] %s17
      %23 = dma.hbm_to_vmem [thread:$0]  %s0, 256, %s18, [#allocation3], 128, 128, 8
    $region5: #{tpu_custom_call.1} parent=1 // pred_fallthru
      _
    // Predicated region
    $region6: #{tpu_custom_call.1} parent=1 // pred_check
      _
    $region7: #{tpu_custom_call.1} parent=1 // pred_check_branch
      %25 = sbr.rel (0) target = $region9
    $region8: #{tpu_custom_call.1} parent=1 // pred_region
      _
    $region9: #{tpu_custom_call.1} parent=1 // pred_fallthru
      _
    // Predicated region
    $region10: #{tpu_custom_call.1} parent=1 // pred_check
      _
    $region11: #{tpu_custom_call.1} parent=1 // pred_check_branch
      %27 = sbr.rel (0) target = $region13
    $region12: #{tpu_custom_call.1} parent=1 // pred_region
      _
    $region13: #{tpu_custom_call.1} parent=1 // pred_fallthru
      _
    // Predicated region
    $region14: #{tpu_custom_call.1} parent=1 // pred_check
      _
    $region15: #{tpu_custom_call.1} parent=1 // pred_check_branch
      %29 = sbr.rel (0) target = $region17
    $region16: #{tpu_custom_call.1} parent=1 // pred_region
      _
    $region17: #{tpu_custom_call.1} parent=1 // pred_fallthru
      _
    // Predicated region
    $region18: #{tpu_custom_call.1} parent=1 // pred_check
      _
    $region19: #{tpu_custom_call.1} parent=1 // pred_check_branch
      %31 = sbr.rel (0) target = $region21
    $region20: #{tpu_custom_call.1} parent=1 // pred_region
      _
    $region21: #{tpu_custom_call.1} parent=1 // pred_fallthru
      _
    // Predicated region
    $region22: #{tpu_custom_call.1} parent=1 // pred_check
      _
    $region23: #{tpu_custom_call.1} parent=1 // pred_check_branch
      %33 = sbr.rel (0) target = $region25
    $region24: #{tpu_custom_call.1} parent=1 // pred_region
      %34 = dma.done [#allocation3], 256
    $region25: #{tpu_custom_call.1} parent=1 // pred_fallthru
      _
    %v35 = vld [vmem:[#allocation2] sm:$0xff]
    %v36 = vld [vmem:[#allocation2 + $0x8] sm:$0xff]
    %v39 = vcombine.high %v35, %v35
    %v40 = vcombine.high %v36, %v36
    %vm43 = vcmask 1043456
    %v44 = vsel %vm43, %v35, 0.0
    %v45 = vsel %vm43, %v39, 0.0
    %v46 = vadd.f32 %v44, %v45
    %47 = vadd.xlane.f32.xlu0 %v46
    %v48 = vpop.xlane.xlu0 %47
    %v49 = vsel %vm43, %v36, 0.0
    %v50 = vsel %vm43, %v40, 0.0
    %v51 = vadd.f32 %v49, %v50
    %52 = vadd.xlane.f32.xlu0 %v51
    %v53 = vpop.xlane.xlu0 %52
    %v54 = vmul.f32 %v48, 0.00390625
    %v55 = vmul.f32 %v53, 0.00390625
    %v56 = vld [vmem:[%s1] sm:$0xf]
    %v57 = vld [vmem:[%s2] sm:$0x1]
    %v58 = vld [vmem:[%s3] sm:$0xff]
    %v59 = vld [vmem:[%s4] sm:$0x1]
    %v60 = vmul.f32 %v54, %v56
    %v61 = vmul.f32 %v55, %v56
    %vm62 = vcmask 60416
    %v63 = vsel %vm62, %v60, 0.0
    %v64 = vrot.slane %v63, 4
    %v65 = vadd.f32 %v63, %v64
    %v66 = vrot.slane %v65, 2
    %v67 = vadd.f32 %v65, %v66
    %v68 = vrot.slane %v67, 1
    %v69 = vadd.f32 %v67, %v68
    %v70 = vsel %vm62, %v61, 0.0
    %v71 = vrot.slane %v70, 4
    %v72 = vadd.f32 %v70, %v71
    %v73 = vrot.slane %v72, 2
    %v74 = vadd.f32 %v72, %v73
    %v75 = vrot.slane %v74, 1
    %v76 = vadd.f32 %v74, %v75
    %v78 = vlaneseq
    %v79 = vshrl.u32 %v78, 7
    %v80 = vsub.s32 0, %v79
    %v81 = vrot.slane %v57, %v80
    %v83 = vadd.f32 %v69, %v81
    %v84 = vadd.f32 %v76, %v81
    %v85 = vxor.u32 %v83, 2147483648
    %v86 = vxor.u32 %v84, 2147483648
    %v87 = vmul.f32 %v85, 1.442695
    %v88 = vpow.pop %v87
    %v89 = vmul.f32 %v86, 1.442695
    %v90 = vpow.pop %v89
    %v91 = vadd.f32 %v88, 1.0
    %v92 = vadd.f32 %v90, 1.0
    %v93 = vrcp.pop %v91
    %v94 = vmul.f32 1.0, %v93
    %v95 = vrcp.pop %v92
    %v96 = vmul.f32 1.0, %v95
    %v97 = vmul.f32 %v83, %v94
    %v98 = vmul.f32 %v84, %v96
    %v99 = vlaneseq
    %v100 = vshrl.u32 %v99, 7
    %v101 = vsub.s32 0, %v100
    %v102 = vrot.slane %v97, %v101
    %104 = vbcast.lane.b32.xlu0 %v102, 256
    %v105 = vpop.permute.xlu0 %104
    %v106 = vlaneseq
    %v107 = vshrl.u32 %v106, 7
    %v108 = vsub.s32 0, %v107
    %v109 = vrot.slane %v98, %v108
    %111 = vbcast.lane.b32.xlu0 %v109, 256
    %v112 = vpop.permute.xlu0 %111
    %v113 = vmul.f32 %v105, %v58
    %v114 = vmul.f32 %v112, %v58
    %vm115 = vcmask 31744
    %v116 = vsel %vm115, %v113, 0.0
    %v117 = vrot.slane %v116, 4
    %v118 = vadd.f32 %v116, %v117
    %v119 = vrot.slane %v118, 2
    %v120 = vadd.f32 %v118, %v119
    %v121 = vrot.slane %v120, 1
    %v122 = vadd.f32 %v120, %v121
    %v123 = vsel %vm115, %v114, 0.0
    %v124 = vrot.slane %v123, 4
    %v125 = vadd.f32 %v123, %v124
    %v126 = vrot.slane %v125, 2
    %v127 = vadd.f32 %v125, %v126
    %v128 = vrot.slane %v127, 1
    %v129 = vadd.f32 %v127, %v128
    %v131 = vlaneseq
    %v132 = vshrl.u32 %v131, 7
    %v133 = vsub.s32 0, %v132
    %v134 = vrot.slane %v59, %v133
    %v136 = vadd.f32 %v122, %v134
    %v137 = vadd.f32 %v129, %v134
    %v138 = vxor.u32 %v136, 2147483648
    %v139 = vxor.u32 %v137, 2147483648
    %v140 = vmul.f32 %v138, 1.442695
    %v141 = vpow.pop %v140
    %v142 = vmul.f32 %v139, 1.442695
    %v143 = vpow.pop %v142
    %v144 = vadd.f32 %v141, 1.0
    %v145 = vadd.f32 %v143, 1.0
    %v146 = vrcp.pop %v144
    %v147 = vmul.f32 1.0, %v146
    %v148 = vrcp.pop %v145
    %v149 = vmul.f32 1.0, %v148
    %v150 = vlaneseq
    %v151 = vshrl.u32 %v150, 7
    %v152 = vsub.s32 0, %v151
    %v153 = vrot.slane %v147, %v152
    %155 = vbcast.lane.b32.xlu0 %v153, 256
    %v156 = vpop.permute.xlu0 %155
    %v157 = vlaneseq
    %v158 = vshrl.u32 %v157, 7
    %v159 = vsub.s32 0, %v158
    %v160 = vrot.slane %v149, %v159
    %162 = vbcast.lane.b32.xlu0 %v160, 256
    %v163 = vpop.permute.xlu0 %162
    %v167 = vunpack.c.l.s4 839922192
    %v168 = vunpack.c.0.s8 %v167
    %v169 = vlaneseq
    %v170 = vshrl.u32 %v169, 7
    %v171 = vsub.s32 %v168, %v170
    %v172 = vrot.slane %v156, %v171
    %v174 = vunpack.c.l.s4 839922192
    %v175 = vunpack.c.0.s8 %v174
    %v176 = vlaneseq
    %v177 = vshrl.u32 %v176, 7
    %v178 = vsub.s32 %v175, %v177
    %v179 = vrot.slane %v163, %v178
    %v182 = vmul.f32 %v35, %v172
    %v183 = vmul.f32 %v36, %v179
    %184 = vst [vmem:[#allocation5] sm:$0xff] %v182
    %185 = vst [vmem:[#allocation5 + $0x8] sm:$0xff] %v183
    // Predicated region
    $region26: #{tpu_custom_call.1} parent=1 // pred_check
      _
    $region27: #{tpu_custom_call.1} parent=1 // pred_check_branch
      %187 = sbr.rel (0) target = $region29
    $region28: #{tpu_custom_call.1} parent=1 // pred_region
      %s189 = ssub.s32 256, 256
      %190 = vsyncadd [#allocation4], %s189
      %s191 = sshll.u32 [#allocation5], 4
      %s192 = int_to_ptr.vmem [resolvable:$true] %s191
      %197 = dma.vmem_to_hbm [thread:$0]  %s192, 256, %s5, [#allocation4], 128, 128, 8
    $region29: #{tpu_custom_call.1} parent=1 // pred_fallthru
      _
    // Predicated region
    $region30: #{tpu_custom_call.1} parent=1 // pred_check
      _
    $region31: #{tpu_custom_call.1} parent=1 // pred_check_branch
      %199 = sbr.rel (0) target = $region33
    $region32: #{tpu_custom_call.1} parent=1 // pred_region
      %200 = dma.done [#allocation4], 256
    $region33: #{tpu_custom_call.1} parent=1 // pred_fallthru
      _
    %201 = vsyncpa [#allocation3], 1
    %202 = vsyncpa [#allocation4], 1

</llo_original>
